<compile_context>
chip_gen: v7x
topology: tpu7x:2x2x1
jax: 0.10.0
libtpu: 0.0.40
codegen_flags: <defaults>
</compile_context>

<pallas_src>
import math

import jax
import jax.numpy as jnp
from jax.experimental import pallas as pl
from jax.experimental.pallas import tpu as pltpu


def _round_up(n, m):
    return ((n + m - 1) // m) * m


def _softplus(x):
    # Matches torch.nn.functional.softplus (beta=1, threshold=20):
    # log(1 + exp(x)) for x <= 20, identity above.
    return jnp.where(x > 20.0, x, jnp.log(1.0 + jnp.exp(jnp.minimum(x, 20.0))))


def _make_hts_kernel(num_classes):
    # Python float -> inlined literal (NOT a captured traced constant).
    inv_log_nc = 1.0 / math.log(float(num_classes))

    def kernel(params_ref, x_ref, out_ref):
        # params_ref lives in SMEM: [wL, wH, b]
        wL = params_ref[0]
        wH = params_ref[1]
        b = params_ref[2]

        # (C_pad, TB) f32: classes on sublanes, batch on lanes.
        x = x_ref[...]

        # Numerically-stable softmax pieces.  Padded class rows / padded batch
        # columns hold -1e9, so exp underflows to exactly 0 and they drop out
        # of every reduction.
        m = jnp.max(x, axis=0, keepdims=True)          # (1, TB)
        xm = x - m
        e = jnp.exp(xm)
        s = jnp.sum(e, axis=0, keepdims=True)          # (1, TB), >= 1

        # entropy = -sum p*log p with log p = (x-m) - log s, p = e/s
        #         = log s - sum(e*(x-m)) / s
        # (no per-element log, no per-element divide; one per-column divide)
        ent = jnp.log(s) - jnp.sum(e * xm, axis=0, keepdims=True) / s

        # normalized entropy; clamp guards log(<=0) for degenerate rows.
        norm_ent = jnp.maximum(ent * inv_log_nc, 1e-12)
        row_term = wH * jnp.log(norm_ent) + b          # (1, TB), broadcast

        temperature = _softplus(wL * x + row_term)
        # Exact divide kept (approx reciprocal can exceed the 1e-5 tolerance).
        out_ref[...] = x / temperature

    return kernel


def hts_forward(logits, wL, wH, b, num_classes, *, tile_lanes=1024):
    """HTS calibration. logits: (B, C). Returns calibrated logits, same shape/dtype."""
    B, C = logits.shape

    C_pad = _round_up(C, 8)                       # class axis -> sublanes
    tile_lanes = _round_up(tile_lanes, 128)
    tile = min(tile_lanes, _round_up(B, 128))     # batch axis -> lanes
    B_pad = _round_up(B, tile)

    # Transposed, padded input.  Pad value -1e9: exp() underflows to 0 so the
    # padding is excluded from max/sum/entropy; padded output entries become
    # +/-inf but are sliced away below (never NaN).
    xt = jnp.full((C_pad, B_pad), -1e9, dtype=jnp.float32)
    xt = xt.at[:C, :B].set(logits.astype(jnp.float32).T)

    params = jnp.array([wL, wH, b], dtype=jnp.float32)   # -> SMEM

    grid = (B_pad // tile,)
    # VMEM per buffer = C_pad * tile * 4 bytes (<= ~4 MiB even for C ~ 1000),
    # comfortably inside the scoped-VMEM default on v5e/v6e/v7x.
    out_t = pl.pallas_call(
        _make_hts_kernel(num_classes),
        out_shape=jax.ShapeDtypeStruct((C_pad, B_pad), jnp.float32),
        grid=grid,
        in_specs=[
            pl.BlockSpec(memory_space=pltpu.MemorySpace.SMEM),   # params, untiled
            pl.BlockSpec((C_pad, tile), lambda i: (0, i)),       # logits tile
        ],
        out_specs=pl.BlockSpec((C_pad, tile), lambda i: (0, i)),
        compiler_params=pltpu.CompilerParams(
            dimension_semantics=("parallel",)),
    )(params, xt)

    return out_t[:C, :B].T.astype(logits.dtype)


def hts_reference(logits, wL, wH, b, num_classes):
    """Pure-JAX reference matching the PyTorch HTSModule forward."""
    x = logits.astype(jnp.float32)
    probs = jax.nn.softmax(x, axis=-1)
    entropy = -jnp.sum(probs * jnp.log(probs + 1e-8), axis=-1, keepdims=True)
    norm_ent = entropy / math.log(float(num_classes))
    pre = wL * x + wH * jnp.log(norm_ent) + b
    temperature = _softplus(pre)
    return (x / temperature).astype(logits.dtype)


if __name__ == "__main__":
    key = jax.random.PRNGKey(0)
    B, num_classes = 16, 10          # small demo: batch=16, 10 classes

    logits = jax.random.normal(key, (B, num_classes), dtype=jnp.float32) * 2.0

    # Parameter init matching nn.Parameter defaults in HTSModule.__init__
    wL = jnp.float32(1.0)
    wH = jnp.float32(1.0)
    b = jnp.float32(0.0)

    out = hts_forward(logits, wL, wH, b, num_classes)
    out = jax.block_until_ready(out)

    ref = hts_reference(logits, wL, wH, b, num_classes)
    assert out.shape == logits.shape and out.dtype == logits.dtype
    assert jnp.allclose(out, ref, atol=1e-5, rtol=5e-5), (
        f"mismatch vs reference, max abs diff = {jnp.max(jnp.abs(out - ref))}")

    print("KERNEL_OK")
</pallas_src>

<mosaic_0001>
module attributes {stable_mosaic.version = 11 : i64} {
  func.func @kernel(%arg0: i32, %arg1: memref<3xf32, #tpu.memory_space<smem>>, %arg2: memref<16x128xf32, #tpu.memory_space<vmem>>, %arg3: memref<16x128xf32, #tpu.memory_space<vmem>>) attributes {dimension_semantics = [#tpu.dimension_semantics<parallel>], iteration_bounds = array<i64: 1>, scalar_prefetch = 0 : i64, scratch_operands = 0 : i64, tpu.core_type = #tpu.core_type<tc>, window_params = [{transform_indices = @transform_0, window_bounds = array<i64: 3>}, {transform_indices = @transform_1, window_bounds = array<i64: 16, 128>}, {transform_indices = @transform_2, window_bounds = array<i64: 16, 128>}]} {
    %c0 = arith.constant 0 : index
    %0 = memref.load %arg1[%c0] : memref<3xf32, #tpu.memory_space<smem>>
    %c1 = arith.constant 1 : index
    %1 = memref.load %arg1[%c1] : memref<3xf32, #tpu.memory_space<smem>>
    %c2 = arith.constant 2 : index
    %2 = memref.load %arg1[%c2] : memref<3xf32, #tpu.memory_space<smem>>
    %c0_0 = arith.constant 0 : index
    %c0_1 = arith.constant 0 : index
    %3 = vector.load %arg2[%c0_0, %c0_1] : memref<16x128xf32, #tpu.memory_space<vmem>>, vector<16x128xf32>
    %cst = arith.constant dense<0xFF800000> : vector<128xf32>
    %4 = vector.multi_reduction <maximumf>, %3, %cst [0] : vector<16x128xf32> to vector<128xf32>
    %5 = vector.shape_cast %4 : vector<128xf32> to vector<1x128xf32>
    %6 = vector.broadcast %5 : vector<1x128xf32> to vector<16x128xf32>
    %7 = arith.subf %3, %6 : vector<16x128xf32>
    %8 = math.exp %7 : vector<16x128xf32>
    %cst_2 = arith.constant dense<0.000000e+00> : vector<128xf32>
    %9 = vector.multi_reduction <add>, %8, %cst_2 [0] : vector<16x128xf32> to vector<128xf32>
    %10 = vector.shape_cast %9 : vector<128xf32> to vector<1x128xf32>
    %11 = math.log %10 : vector<1x128xf32>
    %12 = arith.mulf %8, %7 : vector<16x128xf32>
    %cst_3 = arith.constant dense<0.000000e+00> : vector<128xf32>
    %13 = vector.multi_reduction <add>, %12, %cst_3 [0] : vector<16x128xf32> to vector<128xf32>
    %14 = vector.shape_cast %13 : vector<128xf32> to vector<1x128xf32>
    %15 = arith.divf %14, %10 : vector<1x128xf32>
    %16 = arith.subf %11, %15 : vector<1x128xf32>
    %cst_4 = arith.constant 0.434294492 : f32
    %17 = vector.broadcast %cst_4 : f32 to vector<1x128xf32>
    %18 = arith.mulf %16, %17 : vector<1x128xf32>
    %cst_5 = arith.constant 9.99999996E-13 : f32
    %19 = vector.broadcast %cst_5 : f32 to vector<1x128xf32>
    %20 = arith.maximumf %18, %19 : vector<1x128xf32>
    %21 = math.log %20 : vector<1x128xf32>
    %22 = vector.broadcast %1 : f32 to vector<1x128xf32>
    %23 = arith.mulf %22, %21 : vector<1x128xf32>
    %24 = vector.broadcast %2 : f32 to vector<1x128xf32>
    %25 = arith.addf %23, %24 : vector<1x128xf32>
    %26 = vector.broadcast %0 : f32 to vector<16x128xf32>
    %27 = arith.mulf %26, %3 : vector<16x128xf32>
    %28 = vector.broadcast %25 : vector<1x128xf32> to vector<16x128xf32>
    %29 = arith.addf %27, %28 : vector<16x128xf32>
    %cst_6 = arith.constant 2.000000e+01 : f32
    %30 = vector.broadcast %cst_6 : f32 to vector<16x128xf32>
    %31 = arith.cmpf ogt, %29, %30 : vector<16x128xf32>
    %cst_7 = arith.constant 2.000000e+01 : f32
    %32 = vector.broadcast %cst_7 : f32 to vector<16x128xf32>
    %33 = arith.minimumf %29, %32 : vector<16x128xf32>
    %34 = math.exp %33 : vector<16x128xf32>
    %cst_8 = arith.constant 1.000000e+00 : f32
    %35 = vector.broadcast %cst_8 : f32 to vector<16x128xf32>
    %36 = arith.addf %35, %34 : vector<16x128xf32>
    %37 = math.log %36 : vector<16x128xf32>
    %38 = arith.select %31, %29, %37 : vector<16x128xi1>, vector<16x128xf32>
    %39 = arith.divf %3, %38 : vector<16x128xf32>
    %c0_9 = arith.constant 0 : index
    %c0_10 = arith.constant 0 : index
    %40 = vector.load %arg3[%c0_9, %c0_10] : memref<16x128xf32, #tpu.memory_space<vmem>>, vector<16x128xf32>
    tpu.vector_store %arg3[%c0_9, %c0_10], %39 {strides = array<i32>} : memref<16x128xf32, #tpu.memory_space<vmem>>, vector<16x128xf32>,
    return
  }
  func.func @transform_0(%arg0: i32) -> i32 {
    %c0_i32 = arith.constant 0 : i32
    %c0_i32_0 = arith.constant 0 : i32
    return %c0_i32 : i32
  }
  func.func @transform_1(%arg0: i32) -> (i32, i32) {
    %c0_i32 = arith.constant 0 : i32
    %c0_i32_0 = arith.constant 0 : i32
    return %c0_i32, %arg0 : i32, i32
  }
  func.func @transform_2(%arg0: i32) -> (i32, i32) {
    %c0_i32 = arith.constant 0 : i32
    %c0_i32_0 = arith.constant 0 : i32
    return %c0_i32, %arg0 : i32, i32
  }
}

</mosaic_0001>

<llo_original>
// kernel: tpu_custom_call.1
$region0: #{tpu_custom_call.1}
  #allocation0 [shape = 'u32[]', space=smem, size = 0x4, offset = 0x4, fixed_abs, tag = 'smem constant byte address 0x4 - core index']
  #allocation1 [shape = 'u32[144,128]{1,0:T(1,128)}', space=vmem, size = 0x12000, scoped, tag = 'internal scratch']
  %s0 = inlined_call_operand.hbm [shape: f32[3], index: 0, kind: input, shape index: {}]
  %s1 = inlined_call_operand.hbm [shape: f32[16,128], index: 1, kind: input, shape index: {}]
  %s2 = inlined_call_operand.hbm [shape: f32[16,128], index: 2, kind: output, shape index: {}]
  %s3 = sld [smem:[#allocation0]]
  $region26: #{tpu_custom_call.1} parent=0
    _
  %s5 = ssub.s32 1, %s3
  %s6 = scalar_select 0, %s5, %s3
  $region1: #{tpu_custom_call.1} parent=0
    #allocation2 [shape = 'u8[512]{0}', space=smem, size = 0x200, scoped, tag = 'input window, operand 0, single buffered']
    #allocation3 [shape = 's32[1]{0}', space=sflag, size = 0x4, scoped, tag = 'scoped memory for tpu_custom_call.1']
    #allocation4 [shape = 's32[1]{0}', space=sflag, size = 0x4, scoped, tag = 'scoped memory for tpu_custom_call.1']
    #allocation5 [shape = 's32[1]{0}', space=sflag, size = 0x4, scoped, tag = 'scoped memory for tpu_custom_call.1']
    #allocation6 [shape = 'u8[8192]{0}', space=vmem, size = 0x2000, scoped, tag = 'input window, operand 1, single buffered']
    #allocation7 [shape = 'u8[8192]{0}', space=vmem, size = 0x2000, scoped, tag = 'output window, operand 0, single buffered']
    %7 = vsyncpa [#allocation5], 0
    %8 = vsyncpa [#allocation3], 0
    %9 = vsyncpa [#allocation4], 0
    // Predicated region
    $region2: #{tpu_custom_call.1} parent=1 // pred_check
      _
    $region3: #{tpu_custom_call.1} parent=1 // pred_check_branch
      %11 = sbr.rel (0) target = $region5
    $region4: #{tpu_custom_call.1} parent=1 // pred_region
      %s13 = ssub.s32 16, 16
      %14 = vsyncadd [#allocation5], %s13
      %17 = dma.hbm_to_smem %s0, 16, [#allocation2], [#allocation5]
    $region5: #{tpu_custom_call.1} parent=1 // pred_fallthru
      _
    // Predicated region
    $region6: #{tpu_custom_call.1} parent=1 // pred_check
      _
    $region7: #{tpu_custom_call.1} parent=1 // pred_check_branch
      %19 = sbr.rel (0) target = $region9
    $region8: #{tpu_custom_call.1} parent=1 // pred_region
      %s21 = ssub.s32 256, 256
      %22 = vsyncadd [#allocation3], %s21
      %s23 = sshll.u32 [#allocation6], 4
      %s24 = int_to_ptr.vmem [resolvable:$true] %s23
      %29 = dma.hbm_to_vmem [thread:$0]  %s1, 256, %s24, [#allocation3], 128, 128, 8
    $region9: #{tpu_custom_call.1} parent=1 // pred_fallthru
      _
    // Predicated region
    $region10: #{tpu_custom_call.1} parent=1 // pred_check
      _
    $region11: #{tpu_custom_call.1} parent=1 // pred_check_branch
      %31 = sbr.rel (0) target = $region13
    $region12: #{tpu_custom_call.1} parent=1 // pred_region
      %32 = dma.done [#allocation5], 16
    $region13: #{tpu_custom_call.1} parent=1 // pred_fallthru
      _
    // Predicated region
    $region14: #{tpu_custom_call.1} parent=1 // pred_check
      _
    $region15: #{tpu_custom_call.1} parent=1 // pred_check_branch
      %34 = sbr.rel (0) target = $region17
    $region16: #{tpu_custom_call.1} parent=1 // pred_region
      %35 = dma.done [#allocation3], 256
    $region17: #{tpu_custom_call.1} parent=1 // pred_fallthru
      _
    %36 = sfence
    %s37 = sld [smem:[#allocation2]]
    %s38 = sld [smem:[#allocation2 + $0x1]]
    %s39 = sld [smem:[#allocation2 + $0x2]]
    %v40 = vld [vmem:[#allocation6] sm:$0xff]
    %v41 = vld [vmem:[#allocation6 + $0x8] sm:$0xff]
    %v42 = vmax.f32 %v40, %v41
    %v43 = vrot.slane %v42, 4
    %v44 = vmax.f32 %v42, %v43
    %v45 = vrot.slane %v44, 2
    %v46 = vmax.f32 %v44, %v45
    %v47 = vrot.slane %v46, 1
    %v48 = vmax.f32 %v46, %v47
    %v49 = vsub.f32 %v40, %v48
    %v50 = vsub.f32 %v41, %v48
    %v51 = vmul.f32 %v49, 1.442695
    %v52 = vpow.pop %v51
    %v53 = vmul.f32 %v50, 1.442695
    %v54 = vpow.pop %v53
    %v55 = vadd.f32 %v52, %v54
    %v56 = vrot.slane %v55, 4
    %v57 = vadd.f32 %v55, %v56
    %v58 = vrot.slane %v57, 2
    %v59 = vadd.f32 %v57, %v58
    %v60 = vrot.slane %v59, 1
    %v61 = vadd.f32 %v59, %v60
    %v62 = vlog2.pop %v61
    %v63 = vmul.f32 %v62, 0.6931472
    %v64 = vmul.f32 %v52, %v49
    %v65 = vmul.f32 %v54, %v50
    %v66 = vadd.f32 %v64, %v65
    %v67 = vrot.slane %v66, 4
    %v68 = vadd.f32 %v66, %v67
    %v69 = vrot.slane %v68, 2
    %v70 = vadd.f32 %v68, %v69
    %v71 = vrot.slane %v70, 1
    %v72 = vadd.f32 %v70, %v71
    %v73 = vrcp.pop %v61
    %v74 = vmul.f32 %v72, %v73
    %v75 = vsub.f32 %v63, %v74
    %v76 = vmul.f32 %v75, 0.4342945
    %v77 = vmax.f32 %v76, 1e-12
    %v78 = vlog2.pop %v77
    %v79 = vmul.f32 %v78, 0.6931472
    %v80 = vstv %s38
    %v81 = vmul.f32 %v80, %v79
    %v82 = vstv %s39
    %v83 = vadd.f32 %v81, %v82
    %v84 = vstv %s37
    %v85 = vmul.f32 %v84, %v40
    %v86 = vmul.f32 %v84, %v41
    %v87 = vadd.f32 %v85, %v83
    %v88 = vadd.f32 %v86, %v83
    %vm89 = vcmp.gt.f32.partialorder %v87, 20.0
    %vm90 = vcmp.gt.f32.partialorder %v88, 20.0
    %v91 = vmin.f32 %v87, 20.0
    %v92 = vmin.f32 %v88, 20.0
    %v93 = vmul.f32 %v91, 1.442695
    %v94 = vpow.pop %v93
    %v95 = vmul.f32 %v92, 1.442695
    %v96 = vpow.pop %v95
    %v97 = vadd.f32 %v94, 1.0
    %v98 = vadd.f32 %v96, 1.0
    %v99 = vlog2.pop %v97
    %v100 = vmul.f32 %v99, 0.6931472
    %v101 = vlog2.pop %v98
    %v102 = vmul.f32 %v101, 0.6931472
    %v103 = vsel %vm89, %v87, %v100
    %v104 = vsel %vm90, %v88, %v102
    %v105 = vrcp.pop %v103
    %v106 = vmul.f32 %v40, %v105
    %v107 = vrcp.pop %v104
    %v108 = vmul.f32 %v41, %v107
    %109 = vst [vmem:[#allocation7] sm:$0xff] %v106
    %110 = vst [vmem:[#allocation7 + $0x8] sm:$0xff] %v108
    // Predicated region
    $region18: #{tpu_custom_call.1} parent=1 // pred_check
      _
    $region19: #{tpu_custom_call.1} parent=1 // pred_check_branch
      %112 = sbr.rel (0) target = $region21
    $region20: #{tpu_custom_call.1} parent=1 // pred_region
      %s114 = ssub.s32 256, 256
      %115 = vsyncadd [#allocation4], %s114
      %s116 = sshll.u32 [#allocation7], 4
      %s117 = int_to_ptr.vmem [resolvable:$true] %s116
      %122 = dma.vmem_to_hbm [thread:$0]  %s117, 256, %s2, [#allocation4], 128, 128, 8
    $region21: #{tpu_custom_call.1} parent=1 // pred_fallthru
      _
    // Predicated region
    $region22: #{tpu_custom_call.1} parent=1 // pred_check
      _
    $region23: #{tpu_custom_call.1} parent=1 // pred_check_branch
      %124 = sbr.rel (0) target = $region25
    $region24: #{tpu_custom_call.1} parent=1 // pred_region
      %125 = dma.done [#allocation4], 256
    $region25: #{tpu_custom_call.1} parent=1 // pred_fallthru
      _
    %126 = vsyncpa [#allocation3], 1
    %127 = vsyncpa [#allocation4], 1
    %128 = vsyncpa [#allocation5], 1

</llo_original>
